<compile_context>
chip_gen: v5e
topology: v5e:2x2
jax: 0.10.0
libtpu: 0.0.40
codegen_flags: <defaults>
</compile_context>

<pallas_src>
import functools

import jax
import jax.numpy as jnp
from jax.experimental import pallas as pl
from jax.experimental.pallas import tpu as pltpu


def _choose_tiling(rows, hw, itemsize, target_bytes=2 * 1024 * 1024):
    """Pick (R, tile): rows-per-block (sublane axis) x lanes-per-block.

    Sizes each grid step to ~target_bytes of input so per-step pipeline
    overhead is amortized, while the double-buffered VMEM footprint stays a
    few MiB (safe on v5e/v6e/v7x).  Block-shape legality: R is a multiple of 8
    or equals the full row count; tile is a multiple of 128 or equals HW.
    """
    if rows <= 8:
        r = rows                                   # full (small) sublane extent
        lanes = max(128, (target_bytes // max(r * itemsize, 1)) // 128 * 128)
        tile = hw if hw <= lanes else lanes
        return r, tile
    # rows > 8: start sublane-dense (8 rows) and widen the lane tile first.
    lanes = max(128, (target_bytes // (8 * itemsize)) // 128 * 128)
    if hw > lanes:
        return 8, lanes
    # Whole spatial extent fits in one lane tile: fold more rows per block.
    tile = hw
    r = max(8, (target_bytes // max(hw * itemsize, 1)) // 8 * 8)
    if r >= rows:
        r = rows
    return r, tile


def _eca_stats_kernel(x_ref, sum_ref, max_ref, *, hw, tile, ragged):
    """Phase 1: running per-row (= per (n, c)) spatial sum / max.

    Grid = (row_blocks, spatial_tiles); the f32 outputs are block-resident
    accumulators along the 'arbitrary' spatial axis.
    """
    t = pl.program_id(1)

    @pl.when(t == 0)
    def _init():
        sum_ref[...] = jnp.zeros_like(sum_ref)
        max_ref[...] = jnp.full_like(max_ref, -jnp.inf)

    def _accumulate(mask_tail):
        x = x_ref[...]                                   # (R, tile), x.dtype
        if mask_tail:
            # Only the ragged last tile pays for this (hoisted off the hot
            # path): zero-mask OOB lanes for the sum, -inf for the max.
            lane = jax.lax.broadcasted_iota(jnp.int32, x.shape, 1)
            keep = lane < (hw - t * tile)
            x_sum = jnp.where(keep, x, jnp.zeros_like(x))
            x_max = jnp.where(keep, x, jnp.full_like(x, -jnp.inf))
        else:
            x_sum = x
            x_max = x
        # Sum accumulates in f32 for accuracy; max stays in the input dtype
        # and only the tiny (R, 1) result is widened.
        sum_ref[...] += jnp.sum(x_sum.astype(jnp.float32), axis=-1,
                                keepdims=True)
        part_max = jnp.max(x_max, axis=-1, keepdims=True).astype(jnp.float32)
        max_ref[...] = jnp.maximum(max_ref[...], part_max)

    if ragged:
        last = pl.num_programs(1) - 1

        @pl.when(t < last)
        def _interior():
            _accumulate(False)

        @pl.when(t == last)
        def _tail():
            _accumulate(True)
    else:
        _accumulate(False)


def _eca_gate_kernel(w_ref, sum_ref, max_ref, gate_ref, *, hw, k, neg_slope):
    """Phase 1b (tiny, runs once): shared Conv1d(K) + LeakyReLU over the
    channel axis on both pooled stats, then sigmoid(avg_path + max_path)."""
    n, c = sum_ref.shape
    pad = k // 2
    avg = sum_ref[...] * (1.0 / hw)                      # (N, C) mean
    mx = max_ref[...]                                    # (N, C) max

    def conv_lrelu(v):
        # Zero-padded K-tap conv along channels; K is static & tiny and this
        # runs once, so it is entirely off the bandwidth-bound hot path.
        if pad > 0:
            z = jnp.zeros((n, pad), jnp.float32)
            v = jnp.concatenate([z, v, z], axis=-1)
        out = jnp.zeros((n, c), jnp.float32)
        for tap in range(k):
            out = out + w_ref[tap] * v[:, tap:tap + c]
        return jnp.where(out > 0, out, neg_slope * out)  # LeakyReLU

    gate = jax.nn.sigmoid(conv_lrelu(avg) + conv_lrelu(mx))
    gate_ref[...] = gate.astype(gate_ref.dtype)


def _eca_broadcast_kernel(g_ref, o_ref):
    """Phase 2: lane-replicate the per-row gate across a lane-dense tile."""
    o_ref[...] = jnp.broadcast_to(g_ref[...], o_ref.shape)


def eca_layer(x, conv_weight, *, neg_slope=0.01):
    """x: (N, C, H, W) float; conv_weight: (K,) Conv1d(1,1,K,bias=False) taps.

    Returns sigmoid(conv(avgpool) + conv(maxpool)) broadcast to x.shape
    (the module returns the expanded gate; it does NOT multiply by x).
    """
    N, C, H, W = x.shape
    K = int(conv_weight.shape[0])
    HW = H * W
    rows = N * C
    itemsize = jnp.dtype(x.dtype).itemsize

    R, tile = _choose_tiling(rows, HW, itemsize)
    n_row_blocks = pl.cdiv(rows, R)
    n_tiles = pl.cdiv(HW, tile)
    ragged = (HW % tile) != 0

    # Free reshapes only — no wrapper-side pad / slice passes over x.
    x2 = x.reshape(rows, HW)
    w = conv_weight.reshape(K).astype(jnp.float32)

    # ~2 MiB input blocks double-buffered (+ small f32 temps) => 32 MiB scoped
    # VMEM is safe and portable (>= v5e's 16 MiB default, << v7x's 64 MiB).
    vmem_limit = 32 * 1024 * 1024

    # ---- Phase 1: streaming per-(n, c) spatial sum / max (HBM-bound) ----
    sum_stats, max_stats = pl.pallas_call(
        functools.partial(_eca_stats_kernel, hw=HW, tile=tile, ragged=ragged),
        out_shape=(jax.ShapeDtypeStruct((rows, 1), jnp.float32),
                   jax.ShapeDtypeStruct((rows, 1), jnp.float32)),
        grid=(n_row_blocks, n_tiles),
        in_specs=[pl.BlockSpec((R, tile), lambda r, t: (r, t))],
        out_specs=(pl.BlockSpec((R, 1), lambda r, t: (r, 0)),
                   pl.BlockSpec((R, 1), lambda r, t: (r, 0))),
        compiler_params=pltpu.CompilerParams(
            dimension_semantics=("parallel", "arbitrary"),
            vmem_limit_bytes=vmem_limit),
        cost_estimate=pl.CostEstimate(
            flops=2 * rows * HW,
            transcendentals=0,
            bytes_accessed=rows * HW * itemsize + 2 * rows * 4),
    )(x2)

    # ---- Phase 1b: tiny shared conv + LeakyReLU + sigmoid -> (N, C) gate ----
    gate = pl.pallas_call(
        functools.partial(_eca_gate_kernel, hw=HW, k=K, neg_slope=neg_slope),
        out_shape=jax.ShapeDtypeStruct((N, C), x.dtype),
        grid=(1,),
        in_specs=[pl.BlockSpec(memory_space=pltpu.MemorySpace.SMEM),   # taps
                  pl.BlockSpec((N, C), lambda i: (0, 0)),
                  pl.BlockSpec((N, C), lambda i: (0, 0))],
        out_specs=pl.BlockSpec((N, C), lambda i: (0, 0)),
    )(w, sum_stats.reshape(N, C), max_stats.reshape(N, C))

    # ---- Phase 2: broadcast-write the gate back to x.shape (write-bound) ----
    out2 = pl.pallas_call(
        _eca_broadcast_kernel,
        out_shape=jax.ShapeDtypeStruct((rows, HW), x.dtype),
        grid=(n_row_blocks, n_tiles),
        in_specs=[pl.BlockSpec((R, 1), lambda r, t: (r, 0))],
        out_specs=pl.BlockSpec((R, tile), lambda r, t: (r, t)),
        compiler_params=pltpu.CompilerParams(
            dimension_semantics=("parallel", "parallel"),
            vmem_limit_bytes=vmem_limit),
        cost_estimate=pl.CostEstimate(
            flops=rows * HW,
            transcendentals=0,
            bytes_accessed=rows * HW * itemsize + rows * itemsize),
    )(gate.reshape(rows, 1))

    return out2.reshape(N, C, H, W)


def eca_layer_ref(x, conv_weight, *, neg_slope=0.01):
    """Plain-JAX reference mirroring the PyTorch forward."""
    N, C, H, W = x.shape
    K = int(conv_weight.shape[0])
    pad = K // 2
    avg = x.mean(axis=(2, 3))                   # (N, C)
    mx = x.max(axis=(2, 3))                     # (N, C)

    def conv1d_lrelu(v):
        p = jnp.pad(v, ((0, 0), (pad, pad)))
        out = sum(conv_weight[t] * p[:, t:t + C] for t in range(K))
        return jnp.where(out > 0, out, neg_slope * out)

    gate = jax.nn.sigmoid(conv1d_lrelu(avg) + conv1d_lrelu(mx))
    return jnp.broadcast_to(gate[:, :, None, None], x.shape)


if __name__ == "__main__":
    key = jax.random.PRNGKey(0)
    kx, kw = jax.random.split(key)

    N, C, H, W = 2, 4, 16, 16
    kernel_size = 3                             # ECA conv kernel size (odd)

    x = jax.random.normal(kx, (N, C, H, W), dtype=jnp.float32)
    # Conv1d(1, 1, kernel_size, bias=False).weight has shape (1, 1, K);
    # deterministic synthetic init, squeezed to (K,).
    conv_w = (jax.random.uniform(kw, (kernel_size,), dtype=jnp.float32) - 0.5)

    out = eca_layer(x, conv_w)
    out = jax.block_until_ready(out)

    ref = eca_layer_ref(x, conv_w)
    assert out.shape == x.shape
    assert jnp.allclose(out, ref, atol=1e-5, rtol=1e-5), "mismatch vs reference"

    print("KERNEL_OK")
</pallas_src>

<mosaic_0001>
module attributes {stable_mosaic.version = 11 : i64} {
  func.func @_eca_stats_kernel(%arg0: i32, %arg1: i32, %arg2: memref<8x256xf32, #tpu.memory_space<vmem>>, %arg3: memref<8x1xf32, #tpu.memory_space<vmem>>, %arg4: memref<8x1xf32, #tpu.memory_space<vmem>>) attributes {dimension_semantics = [#tpu.dimension_semantics<parallel>, #tpu.dimension_semantics<arbitrary>], iteration_bounds = array<i64: 1, 1>, scalar_prefetch = 0 : i64, scratch_operands = 0 : i64, tpu.core_type = #tpu.core_type<tc>, window_params = [{transform_indices = @transform_0, window_bounds = array<i64: 8, 256>}, {transform_indices = @transform_1, window_bounds = array<i64: 8, 1>}, {transform_indices = @transform_2, window_bounds = array<i64: 8, 1>}]} {
    %c0_i32 = arith.constant 0 : i32
    %0 = arith.cmpi eq, %arg1, %c0_i32 : i32
    %1 = arith.extui %0 : i1 to i32
    %c0_i32_0 = arith.constant 0 : i32
    %2 = arith.cmpi ne, %1, %c0_i32_0 : i32
    scf.if %2 {
      %cst_11 = arith.constant 0.000000e+00 : f32
      %14 = vector.broadcast %cst_11 : f32 to vector<8x1xf32>
      %c0_12 = arith.constant 0 : index
      %c0_13 = arith.constant 0 : index
      %15 = vector.load %arg3[%c0_12, %c0_13] : memref<8x1xf32, #tpu.memory_space<vmem>>, vector<8x1xf32>
      tpu.vector_store %arg3[%c0_12, %c0_13], %14 {strides = array<i32>} : memref<8x1xf32, #tpu.memory_space<vmem>>, vector<8x1xf32>,
      %cst_14 = arith.constant 0xFF800000 : f32
      %16 = vector.broadcast %cst_14 : f32 to vector<8x1xf32>
      %c0_15 = arith.constant 0 : index
      %c0_16 = arith.constant 0 : index
      %17 = vector.load %arg4[%c0_15, %c0_16] : memref<8x1xf32, #tpu.memory_space<vmem>>, vector<8x1xf32>
      tpu.vector_store %arg4[%c0_15, %c0_16], %16 {strides = array<i32>} : memref<8x1xf32, #tpu.memory_space<vmem>>, vector<8x1xf32>,
    } else {
    }
    %c0 = arith.constant 0 : index
    %c0_1 = arith.constant 0 : index
    %3 = vector.load %arg2[%c0, %c0_1] : memref<8x256xf32, #tpu.memory_space<vmem>>, vector<8x256xf32>
    %c0_2 = arith.constant 0 : index
    %c0_3 = arith.constant 0 : index
    %4 = vector.load %arg3[%c0_2, %c0_3] : memref<8x1xf32, #tpu.memory_space<vmem>>, vector<8x1xf32>
    %cst = arith.constant dense<0.000000e+00> : vector<8xf32>
    %5 = vector.multi_reduction <add>, %3, %cst [1] : vector<8x256xf32> to vector<8xf32>
    %6 = vector.shape_cast %5 : vector<8xf32> to vector<8x1xf32>
    %7 = arith.addf %4, %6 : vector<8x1xf32>
    %c0_4 = arith.constant 0 : index
    %c0_5 = arith.constant 0 : index
    %8 = vector.load %arg3[%c0_4, %c0_5] : memref<8x1xf32, #tpu.memory_space<vmem>>, vector<8x1xf32>
    tpu.vector_store %arg3[%c0_4, %c0_5], %7 {strides = array<i32>} : memref<8x1xf32, #tpu.memory_space<vmem>>, vector<8x1xf32>,
    %cst_6 = arith.constant dense<0xFF800000> : vector<8xf32>
    %9 = vector.multi_reduction <maximumf>, %3, %cst_6 [1] : vector<8x256xf32> to vector<8xf32>
    %10 = vector.shape_cast %9 : vector<8xf32> to vector<8x1xf32>
    %c0_7 = arith.constant 0 : index
    %c0_8 = arith.constant 0 : index
    %11 = vector.load %arg4[%c0_7, %c0_8] : memref<8x1xf32, #tpu.memory_space<vmem>>, vector<8x1xf32>
    %12 = arith.maximumf %11, %10 : vector<8x1xf32>
    %c0_9 = arith.constant 0 : index
    %c0_10 = arith.constant 0 : index
    %13 = vector.load %arg4[%c0_9, %c0_10] : memref<8x1xf32, #tpu.memory_space<vmem>>, vector<8x1xf32>
    tpu.vector_store %arg4[%c0_9, %c0_10], %12 {strides = array<i32>} : memref<8x1xf32, #tpu.memory_space<vmem>>, vector<8x1xf32>,
    return
  }
  func.func @transform_0(%arg0: i32, %arg1: i32) -> (i32, i32) {
    %c0_i32 = arith.constant 0 : i32
    return %arg0, %arg1 : i32, i32
  }
  func.func @transform_1(%arg0: i32, %arg1: i32) -> (i32, i32) {
    %c0_i32 = arith.constant 0 : i32
    %c0_i32_0 = arith.constant 0 : i32
    return %arg0, %c0_i32 : i32, i32
  }
  func.func @transform_2(%arg0: i32, %arg1: i32) -> (i32, i32) {
    %c0_i32 = arith.constant 0 : i32
    %c0_i32_0 = arith.constant 0 : i32
    return %arg0, %c0_i32 : i32, i32
  }
}

</mosaic_0001>

<llo_original>
// kernel: tpu_custom_call.1
$region0: #{tpu_custom_call.1}
  #allocation0 [shape = 'u32[]', space=smem, size = 0x4, offset = 0x4, fixed_abs, tag = 'smem constant byte address 0x4 - core index']
  #allocation1 [shape = 'u32[72,128]{1,0:T(1,128)}', space=vmem, size = 0x9000, scoped, tag = 'internal scratch']
  %s0 = inlined_call_operand.hbm [shape: f32[8,256], index: 0, kind: input, shape index: {}]
  %s1 = inlined_call_operand.vmem [shape: f32[8,1], index: 1, kind: output, shape index: {0}]
  %s2 = inlined_call_operand.vmem [shape: f32[8,1], index: 2, kind: output, shape index: {1}]
  %3 = xla_tuple %s1, %s2
  %s4 = sld [smem:[#allocation0]]
  $region30: #{tpu_custom_call.1} parent=0
    _
  %s6 = ssub.s32 1, %s4
  %s7 = scalar_select 0, %s6, %s4
  $region1: #{tpu_custom_call.1} parent=0
    #allocation2 [shape = 'u8[8192]{0}', space=vmem, size = 0x2000, scoped, tag = 'input window, operand 0, single buffered']
    #allocation3 [shape = 's32[1]{0}', space=sflag, size = 0x4, scoped, tag = 'scoped memory for tpu_custom_call.1']
    %8 = vsyncpa [#allocation3], 0
    // Predicated region
    $region2: #{tpu_custom_call.1} parent=1 // pred_check
      _
    $region3: #{tpu_custom_call.1} parent=1 // pred_check_branch
      %10 = sbr.rel (0) target = $region5
    $region4: #{tpu_custom_call.1} parent=1 // pred_region
      %12 = vsyncadd [#allocation3], 0
      %s14 = sshll.u32 %s0, 4
      %s15 = int_to_ptr.hbm [resolvable:$true] %s14
      %s16 = sshll.u32 [#allocation2], 4
      %s17 = int_to_ptr.vmem [resolvable:$true] %s16
      %19 = dma.hbm_to_vmem [thread:$0]  %s15, 256, %s17, [#allocation3]
    $region5: #{tpu_custom_call.1} parent=1 // pred_fallthru
      _
    // Predicated region
    $region6: #{tpu_custom_call.1} parent=1 // pred_check
      _
    $region7: #{tpu_custom_call.1} parent=1 // pred_check_branch
      %21 = sbr.rel (0) target = $region9
    $region8: #{tpu_custom_call.1} parent=1 // pred_region
      %23 = dma.done [#allocation3], 256
    $region9: #{tpu_custom_call.1} parent=1 // pred_fallthru
      _
    %p24 = scmp.eq.s32.totalorder 0, 0
    // Predicated region
    $region10: #{tpu_custom_call.1} parent=1 // pred_check
      %p25 = pneg %p24
    $region11: #{tpu_custom_call.1} parent=1 // pred_check_branch
      %27 = sbr.rel (%p25) target = $region13
    $region12: #{tpu_custom_call.1} parent=1 // pred_region
      %vm28 = vcmask 7168
      %29 = vst.msk [vmem:[%s1] sm:$0xff] %vm28, 0.0
      %30 = vst.msk [vmem:[%s2] sm:$0xff] %vm28, -inf
    $region13: #{tpu_custom_call.1} parent=1 // pred_fallthru
      _
    %v31 = vld [vmem:[#allocation2] sm:$0xff]
    %v32 = vld [vmem:[#allocation2 + $0x8] sm:$0xff]
    %v33 = vld [vmem:[%s1] sm:$0xff]
    %v34 = vadd.f32 %v31, %v32
    %35 = vadd.xlane.f32.xlu0 %v34
    %v36 = vpop.xlane.xlu0 %35
    %v37 = vadd.f32 %v33, %v36
    %vm38 = vcmask 7168
    %39 = vst.msk [vmem:[%s1] sm:$0xff] %vm38, %v37
    %v40 = vmax.f32 %v31, %v32
    %41 = vmax.xlane.f32.xlu0 %v40
    %v42 = vpop.xlane.xlu0 %41
    %v43 = vld [vmem:[%s2] sm:$0xff]
    %v44 = vmax.f32 %v43, %v42
    %45 = vst.msk [vmem:[%s2] sm:$0xff] %vm38, %v44
    // Predicated region
    $region14: #{tpu_custom_call.1} parent=1 // pred_check
      _
    $region15: #{tpu_custom_call.1} parent=1 // pred_check_branch
      %47 = sbr.rel (0) target = $region17
    $region16: #{tpu_custom_call.1} parent=1 // pred_region
      _
    $region17: #{tpu_custom_call.1} parent=1 // pred_fallthru
      _
    // Predicated region
    $region18: #{tpu_custom_call.1} parent=1 // pred_check
      _
    $region19: #{tpu_custom_call.1} parent=1 // pred_check_branch
      %49 = sbr.rel (0) target = $region21
    $region20: #{tpu_custom_call.1} parent=1 // pred_region
      _
    $region21: #{tpu_custom_call.1} parent=1 // pred_fallthru
      _
    // Predicated region
    $region22: #{tpu_custom_call.1} parent=1 // pred_check
      _
    $region23: #{tpu_custom_call.1} parent=1 // pred_check_branch
      %51 = sbr.rel (0) target = $region25
    $region24: #{tpu_custom_call.1} parent=1 // pred_region
      _
    $region25: #{tpu_custom_call.1} parent=1 // pred_fallthru
      _
    // Predicated region
    $region26: #{tpu_custom_call.1} parent=1 // pred_check
      _
    $region27: #{tpu_custom_call.1} parent=1 // pred_check_branch
      %53 = sbr.rel (0) target = $region29
    $region28: #{tpu_custom_call.1} parent=1 // pred_region
      _
    $region29: #{tpu_custom_call.1} parent=1 // pred_fallthru
      _
    %54 = vsyncpa [#allocation3], 1

</llo_original>
